<compile_context>
chip_gen: v5e
topology: v5e:2x2
jax: 0.10.0
libtpu: 0.0.40
codegen_flags: <defaults>
</compile_context>

<pallas_src>
import jax
import jax.numpy as jnp
from jax.experimental import pallas as pl
from jax.experimental.pallas import tpu as pltpu


# ---------------------------------------------------------------------------
# Kernel
# ---------------------------------------------------------------------------
def _make_cross_stitch_kernel(num_tasks):
    T = num_tasks

    def kernel(alpha_ref, *refs):
        # alpha_ref: SMEM [T, T] (scalar-prefetched).
        # refs: T input tiles [tb, tf] followed by T output tiles [tb, tf].
        x_refs = refs[:T]
        o_refs = refs[T:]

        # Hoist the T*T mixing scalars once (scalar-slot hygiene) and force
        # f32 accumulation regardless of the alpha / input dtype.
        a = [[alpha_ref[s, t].astype(jnp.float32) for t in range(T)]
             for s in range(T)]

        # t-outer: one f32 accumulator tile live at a time.  Input tiles are
        # re-read from VMEM per t — free for this HBM-bound kernel, and it
        # keeps Mosaic's internal VMEM temporaries bounded at large tiles.
        for t in range(T):
            acc = x_refs[0][...].astype(jnp.float32) * a[0][t]
            for s in range(1, T):
                acc = acc + x_refs[s][...].astype(jnp.float32) * a[s][t]
            o_refs[t][...] = acc.astype(o_refs[t].dtype)

    return kernel


# ---------------------------------------------------------------------------
# Wrapper / tiling policy
# ---------------------------------------------------------------------------
_SUBLANE_BY_ITEMSIZE = {4: 8, 2: 16, 1: 32}   # native sublane packing
_TINY_BYTES = 1 * 1024 * 1024                 # below this, use fused XLA path
_TF_CAP = 2048
_TB_CAP = 1024


def _round_up(x, m):
    return ((x + m - 1) // m) * m


def _round_down(x, m):
    return max((x // m) * m, m)


def _tpu_vmem_bytes():
    """Best-effort VMEM capacity query; conservative (v7x-sized) fallback."""
    try:
        info = pltpu.get_tpu_info()
        for attr in ("vmem_capacity_bytes", "vmem_bytes", "vmem_size_bytes"):
            v = getattr(info, attr, None)
            if v:
                return int(v)
    except Exception:
        pass
    return 64 * 1024 * 1024


def cross_stitch_unit(inputs, alpha, *, force_pallas=False, donate_inputs=False):
    """out[t] = sum_s inputs[s] * alpha[s, t].

    inputs: list of T arrays [B, F]; alpha: [T, T]. Returns list of T [B, F].
    """
    T = len(inputs)
    B, F = inputs[0].shape
    dtype = inputs[0].dtype
    itemsize = int(jnp.dtype(dtype).itemsize)

    total_bytes = T * B * F * itemsize
    if not force_pallas and total_bytes < _TINY_BYTES:
        # Tiny workload: pallas_call launch + pipeline prologue dominates a
        # sub-microsecond roofline; plain per-task VPU sums, no stacked temp,
        # no accidental MXU matmul with K=T.
        return [
            sum(inputs[s] * alpha[s, t] for s in range(T)).astype(dtype)
            for t in range(T)
        ]

    # --- VMEM budget (generation-aware, conservative fallback) -------------
    vmem_cap = _tpu_vmem_bytes()
    if vmem_cap >= 128 * 1024 * 1024:          # v5e / v6e
        vmem_limit = 96 * 1024 * 1024
        tile_budget = 40 * 1024 * 1024
    else:                                      # v7x (64 MiB) / unknown
        vmem_limit = 32 * 1024 * 1024
        tile_budget = 14 * 1024 * 1024

    # Per-tile-element residency: double-buffered T inputs + T outputs in the
    # I/O dtype, plus ONE f32 accumulator tile (t-outer) of internal scratch.
    sublane = _SUBLANE_BY_ITEMSIZE.get(itemsize, 8)
    bytes_per_elem = 4 * T * itemsize + 4
    max_tile_elems = max(tile_budget // bytes_per_elem, sublane * 128)

    # --- tile shape: lane-dense tf, dtype-aware sublane-aligned tb ---------
    if F <= 128:
        tf = F                                  # full dim (always legal)
    else:
        tf = min(_round_down(F, 128), _TF_CAP)
        while tf > 128 and tf * sublane > max_tile_elems:
            tf -= 128

    if B <= sublane:
        tb = B                                  # full dim (always legal)
    else:
        tb_budget = max(max_tile_elems // tf, sublane)
        tb = max(sublane,
                 min(_round_down(B, sublane), _TB_CAP,
                     _round_down(tb_budget, sublane)))

    grid_b = pl.cdiv(B, tb)
    grid_f = pl.cdiv(F, tf)

    # v7x has 2 TensorCores: make sure at least one parallel axis has >= 2
    # steps so both cores (and the full HBM BW) are used.  One extra grid
    # step (~0.35 us) is noise on v5e/v6e.
    if grid_b == 1 and grid_f == 1:
        if tf >= 256:
            tf = _round_up(tf // 2, 128)
        elif tb >= 2 * sublane:
            tb = _round_up(tb // 2, sublane)
        grid_b = pl.cdiv(B, tb)
        grid_f = pl.cdiv(F, tf)

    grid = (grid_b, grid_f)
    tile_spec = pl.BlockSpec((tb, tf), lambda i, j, a_ref: (i, j))

    io_aliases = {t + 1: t for t in range(T)} if donate_inputs else {}

    kernel = _make_cross_stitch_kernel(T)
    outs = pl.pallas_call(
        kernel,
        out_shape=tuple(jax.ShapeDtypeStruct((B, F), dtype) for _ in range(T)),
        grid_spec=pltpu.PrefetchScalarGridSpec(
            # alpha [T, T] lands in SMEM before the grid runs.
            num_scalar_prefetch=1,
            grid=grid,
            in_specs=[tile_spec] * T,
            out_specs=tuple([tile_spec] * T),
        ),
        compiler_params=pltpu.CompilerParams(
            dimension_semantics=("parallel", "parallel"),
            vmem_limit_bytes=vmem_limit,
        ),
        input_output_aliases=io_aliases,
    )(alpha, *inputs)

    return list(outs)


# ---------------------------------------------------------------------------
# Self-test
# ---------------------------------------------------------------------------
if __name__ == "__main__":
    num_tasks = 3
    key = jax.random.PRNGKey(0)
    k_in1, k_in2, k_a = jax.random.split(key, 3)

    # Module __init__: alpha = eye(num_tasks). Perturb slightly so the
    # cross-task mixing path is actually exercised.
    alpha = jnp.eye(num_tasks, dtype=jnp.float32) + \
        0.05 * jax.random.normal(k_a, (num_tasks, num_tasks), jnp.float32)

    def reference(x_all, a):
        return jnp.einsum('sbf,st->tbf', x_all, a)

    # Case 1: aligned small shape -> Pallas path, lane-dense tiles, grid >= 2.
    B1, F1 = 16, 256
    x1 = jax.random.normal(k_in1, (num_tasks, B1, F1), jnp.float32)
    outs1 = cross_stitch_unit([x1[i] for i in range(num_tasks)], alpha,
                              force_pallas=True)
    outs1 = [jax.block_until_ready(o) for o in outs1]
    ref1 = reference(x1, alpha)
    for t in range(num_tasks):
        assert outs1[t].shape == (B1, F1)
        assert jnp.allclose(outs1[t], ref1[t], atol=1e-5, rtol=1e-5), \
            f"mismatch (aligned) task {t}"

    # Case 2: unaligned shape -> Pallas path with boundary-clamped tiles
    # (no pad / slice HBM round-trips).
    B2, F2 = 4, 200
    x2 = jax.random.normal(k_in2, (num_tasks, B2, F2), jnp.float32)
    outs2 = cross_stitch_unit([x2[i] for i in range(num_tasks)], alpha,
                              force_pallas=True)
    outs2 = [jax.block_until_ready(o) for o in outs2]
    ref2 = reference(x2, alpha)
    for t in range(num_tasks):
        assert outs2[t].shape == (B2, F2)
        assert jnp.allclose(outs2[t], ref2[t], atol=1e-5, rtol=1e-5), \
            f"mismatch (unaligned) task {t}"

    # Case 3: tiny workload -> auto-dispatch to the plain XLA VPU path.
    outs3 = cross_stitch_unit([x2[i] for i in range(num_tasks)], alpha)
    outs3 = [jax.block_until_ready(o) for o in outs3]
    for t in range(num_tasks):
        assert jnp.allclose(outs3[t], ref2[t], atol=1e-5, rtol=1e-5), \
            f"mismatch (fallback) task {t}"

    print("KERNEL_OK")
</pallas_src>

<mosaic_0001>
module attributes {stable_mosaic.version = 11 : i64} {
  func.func @kernel(%arg0: i32, %arg1: i32, %arg2: memref<3x3xf32, #tpu.memory_space<smem>>, %arg3: memref<16x128xf32, #tpu.memory_space<vmem>>, %arg4: memref<16x128xf32, #tpu.memory_space<vmem>>, %arg5: memref<16x128xf32, #tpu.memory_space<vmem>>, %arg6: memref<16x128xf32, #tpu.memory_space<vmem>>, %arg7: memref<16x128xf32, #tpu.memory_space<vmem>>, %arg8: memref<16x128xf32, #tpu.memory_space<vmem>>) attributes {dimension_semantics = [#tpu.dimension_semantics<parallel>, #tpu.dimension_semantics<parallel>], iteration_bounds = array<i64: 1, 2>, scalar_prefetch = 1 : i64, scratch_operands = 0 : i64, tpu.core_type = #tpu.core_type<tc>, window_params = [{transform_indices = @transform_0, window_bounds = array<i64: 16, 128>}, {transform_indices = @transform_1, window_bounds = array<i64: 16, 128>}, {transform_indices = @transform_2, window_bounds = array<i64: 16, 128>}, {transform_indices = @transform_3, window_bounds = array<i64: 16, 128>}, {transform_indices = @transform_4, window_bounds = array<i64: 16, 128>}, {transform_indices = @transform_5, window_bounds = array<i64: 16, 128>}]} {
    %c0 = arith.constant 0 : index
    %c0_0 = arith.constant 0 : index
    %0 = memref.load %arg2[%c0, %c0_0] : memref<3x3xf32, #tpu.memory_space<smem>>
    %c0_1 = arith.constant 0 : index
    %c1 = arith.constant 1 : index
    %1 = memref.load %arg2[%c0_1, %c1] : memref<3x3xf32, #tpu.memory_space<smem>>
    %c0_2 = arith.constant 0 : index
    %c2 = arith.constant 2 : index
    %2 = memref.load %arg2[%c0_2, %c2] : memref<3x3xf32, #tpu.memory_space<smem>>
    %c1_3 = arith.constant 1 : index
    %c0_4 = arith.constant 0 : index
    %3 = memref.load %arg2[%c1_3, %c0_4] : memref<3x3xf32, #tpu.memory_space<smem>>
    %c1_5 = arith.constant 1 : index
    %c1_6 = arith.constant 1 : index
    %4 = memref.load %arg2[%c1_5, %c1_6] : memref<3x3xf32, #tpu.memory_space<smem>>
    %c1_7 = arith.constant 1 : index
    %c2_8 = arith.constant 2 : index
    %5 = memref.load %arg2[%c1_7, %c2_8] : memref<3x3xf32, #tpu.memory_space<smem>>
    %c2_9 = arith.constant 2 : index
    %c0_10 = arith.constant 0 : index
    %6 = memref.load %arg2[%c2_9, %c0_10] : memref<3x3xf32, #tpu.memory_space<smem>>
    %c2_11 = arith.constant 2 : index
    %c1_12 = arith.constant 1 : index
    %7 = memref.load %arg2[%c2_11, %c1_12] : memref<3x3xf32, #tpu.memory_space<smem>>
    %c2_13 = arith.constant 2 : index
    %c2_14 = arith.constant 2 : index
    %8 = memref.load %arg2[%c2_13, %c2_14] : memref<3x3xf32, #tpu.memory_space<smem>>
    %c0_15 = arith.constant 0 : index
    %c0_16 = arith.constant 0 : index
    %9 = vector.load %arg3[%c0_15, %c0_16] : memref<16x128xf32, #tpu.memory_space<vmem>>, vector<16x128xf32>
    %10 = vector.broadcast %0 : f32 to vector<16x128xf32>
    %11 = arith.mulf %9, %10 : vector<16x128xf32>
    %c0_17 = arith.constant 0 : index
    %c0_18 = arith.constant 0 : index
    %12 = vector.load %arg4[%c0_17, %c0_18] : memref<16x128xf32, #tpu.memory_space<vmem>>, vector<16x128xf32>
    %13 = vector.broadcast %3 : f32 to vector<16x128xf32>
    %14 = arith.mulf %12, %13 : vector<16x128xf32>
    %15 = arith.addf %11, %14 : vector<16x128xf32>
    %c0_19 = arith.constant 0 : index
    %c0_20 = arith.constant 0 : index
    %16 = vector.load %arg5[%c0_19, %c0_20] : memref<16x128xf32, #tpu.memory_space<vmem>>, vector<16x128xf32>
    %17 = vector.broadcast %6 : f32 to vector<16x128xf32>
    %18 = arith.mulf %16, %17 : vector<16x128xf32>
    %19 = arith.addf %15, %18 : vector<16x128xf32>
    %c0_21 = arith.constant 0 : index
    %c0_22 = arith.constant 0 : index
    %20 = vector.load %arg6[%c0_21, %c0_22] : memref<16x128xf32, #tpu.memory_space<vmem>>, vector<16x128xf32>
    tpu.vector_store %arg6[%c0_21, %c0_22], %19 {strides = array<i32>} : memref<16x128xf32, #tpu.memory_space<vmem>>, vector<16x128xf32>,
    %c0_23 = arith.constant 0 : index
    %c0_24 = arith.constant 0 : index
    %21 = vector.load %arg3[%c0_23, %c0_24] : memref<16x128xf32, #tpu.memory_space<vmem>>, vector<16x128xf32>
    %22 = vector.broadcast %1 : f32 to vector<16x128xf32>
    %23 = arith.mulf %21, %22 : vector<16x128xf32>
    %c0_25 = arith.constant 0 : index
    %c0_26 = arith.constant 0 : index
    %24 = vector.load %arg4[%c0_25, %c0_26] : memref<16x128xf32, #tpu.memory_space<vmem>>, vector<16x128xf32>
    %25 = vector.broadcast %4 : f32 to vector<16x128xf32>
    %26 = arith.mulf %24, %25 : vector<16x128xf32>
    %27 = arith.addf %23, %26 : vector<16x128xf32>
    %c0_27 = arith.constant 0 : index
    %c0_28 = arith.constant 0 : index
    %28 = vector.load %arg5[%c0_27, %c0_28] : memref<16x128xf32, #tpu.memory_space<vmem>>, vector<16x128xf32>
    %29 = vector.broadcast %7 : f32 to vector<16x128xf32>
    %30 = arith.mulf %28, %29 : vector<16x128xf32>
    %31 = arith.addf %27, %30 : vector<16x128xf32>
    %c0_29 = arith.constant 0 : index
    %c0_30 = arith.constant 0 : index
    %32 = vector.load %arg7[%c0_29, %c0_30] : memref<16x128xf32, #tpu.memory_space<vmem>>, vector<16x128xf32>
    tpu.vector_store %arg7[%c0_29, %c0_30], %31 {strides = array<i32>} : memref<16x128xf32, #tpu.memory_space<vmem>>, vector<16x128xf32>,
    %c0_31 = arith.constant 0 : index
    %c0_32 = arith.constant 0 : index
    %33 = vector.load %arg3[%c0_31, %c0_32] : memref<16x128xf32, #tpu.memory_space<vmem>>, vector<16x128xf32>
    %34 = vector.broadcast %2 : f32 to vector<16x128xf32>
    %35 = arith.mulf %33, %34 : vector<16x128xf32>
    %c0_33 = arith.constant 0 : index
    %c0_34 = arith.constant 0 : index
    %36 = vector.load %arg4[%c0_33, %c0_34] : memref<16x128xf32, #tpu.memory_space<vmem>>, vector<16x128xf32>
    %37 = vector.broadcast %5 : f32 to vector<16x128xf32>
    %38 = arith.mulf %36, %37 : vector<16x128xf32>
    %39 = arith.addf %35, %38 : vector<16x128xf32>
    %c0_35 = arith.constant 0 : index
    %c0_36 = arith.constant 0 : index
    %40 = vector.load %arg5[%c0_35, %c0_36] : memref<16x128xf32, #tpu.memory_space<vmem>>, vector<16x128xf32>
    %41 = vector.broadcast %8 : f32 to vector<16x128xf32>
    %42 = arith.mulf %40, %41 : vector<16x128xf32>
    %43 = arith.addf %39, %42 : vector<16x128xf32>
    %c0_37 = arith.constant 0 : index
    %c0_38 = arith.constant 0 : index
    %44 = vector.load %arg8[%c0_37, %c0_38] : memref<16x128xf32, #tpu.memory_space<vmem>>, vector<16x128xf32>
    tpu.vector_store %arg8[%c0_37, %c0_38], %43 {strides = array<i32>} : memref<16x128xf32, #tpu.memory_space<vmem>>, vector<16x128xf32>,
    return
  }
  func.func @transform_0(%arg0: i32, %arg1: i32, %arg2: memref<3x3xf32, #tpu.memory_space<smem>>) -> (i32, i32) {
    %c0_i32 = arith.constant 0 : i32
    return %arg0, %arg1 : i32, i32
  }
  func.func @transform_1(%arg0: i32, %arg1: i32, %arg2: memref<3x3xf32, #tpu.memory_space<smem>>) -> (i32, i32) {
    %c0_i32 = arith.constant 0 : i32
    return %arg0, %arg1 : i32, i32
  }
  func.func @transform_2(%arg0: i32, %arg1: i32, %arg2: memref<3x3xf32, #tpu.memory_space<smem>>) -> (i32, i32) {
    %c0_i32 = arith.constant 0 : i32
    return %arg0, %arg1 : i32, i32
  }
  func.func @transform_3(%arg0: i32, %arg1: i32, %arg2: memref<3x3xf32, #tpu.memory_space<smem>>) -> (i32, i32) {
    %c0_i32 = arith.constant 0 : i32
    return %arg0, %arg1 : i32, i32
  }
  func.func @transform_4(%arg0: i32, %arg1: i32, %arg2: memref<3x3xf32, #tpu.memory_space<smem>>) -> (i32, i32) {
    %c0_i32 = arith.constant 0 : i32
    return %arg0, %arg1 : i32, i32
  }
  func.func @transform_5(%arg0: i32, %arg1: i32, %arg2: memref<3x3xf32, #tpu.memory_space<smem>>) -> (i32, i32) {
    %c0_i32 = arith.constant 0 : i32
    return %arg0, %arg1 : i32, i32
  }
}

</mosaic_0001>

<llo_original>
// kernel: tpu_custom_call.1
$region0: #{tpu_custom_call.1}
  #allocation0 [shape = 'u32[]', space=smem, size = 0x4, offset = 0x4, fixed_abs, tag = 'smem constant byte address 0x4 - core index']
  #allocation1 [shape = 'u32[72,128]{1,0:T(1,128)}', space=vmem, size = 0x9000, scoped, tag = 'internal scratch']
  #allocation2 [shape = 's32[1]{0}', space=sflag, size = 0x4, scoped, tag = 'scoped memory for tpu_custom_call.1']
  #allocation3 [shape = 'u8[2048]{0}', space=smem, size = 0x800, scoped, tag = 'prefetched SMEM operand 0']
  %s0 = inlined_call_operand.hbm [shape: f32[3,3], index: 0, kind: input, shape index: {}]
  %s1 = inlined_call_operand.hbm [shape: f32[16,256], index: 1, kind: input, shape index: {}]
  %s2 = inlined_call_operand.hbm [shape: f32[16,256], index: 2, kind: input, shape index: {}]
  %s3 = inlined_call_operand.hbm [shape: f32[16,256], index: 3, kind: input, shape index: {}]
  %s4 = inlined_call_operand.hbm [shape: f32[16,256], index: 4, kind: output, shape index: {0}]
  %s5 = inlined_call_operand.hbm [shape: f32[16,256], index: 5, kind: output, shape index: {1}]
  %s6 = inlined_call_operand.hbm [shape: f32[16,256], index: 6, kind: output, shape index: {2}]
  %7 = xla_tuple %s4, %s5, %s6
  %s8 = sld [smem:[#allocation0]]
  $region73: #{tpu_custom_call.1} parent=0
    _
  %s10 = ssub.s32 1, %s8
  %s11 = scalar_select 0, %s10, %s8
  %s13 = sshll.u32 %s0, 4
  %s14 = int_to_ptr.hbm [resolvable:$true] %s13
  %16 = dma.hbm_to_smem %s14, 64, [#allocation3], [#allocation2]
  %18 = dma.done [#allocation2], 64
  %19 = sfence
  $region1: #{tpu_custom_call.1} parent=0
    #allocation4 [shape = 'u8[16384]{0}', space=vmem, size = 0x4000, scoped, tag = 'input window, operand 1']
    #allocation5 [shape = 's32[2]{0}', space=sflag, size = 0x8, scoped, tag = 'scoped memory for tpu_custom_call.1']
    #allocation6 [shape = 's32[2]{0}', space=sflag, size = 0x8, scoped, tag = 'scoped memory for tpu_custom_call.1']
    #allocation7 [shape = 'u8[16384]{0}', space=vmem, size = 0x4000, scoped, tag = 'input window, operand 2']
    #allocation8 [shape = 's32[2]{0}', space=sflag, size = 0x8, scoped, tag = 'scoped memory for tpu_custom_call.1']
    #allocation9 [shape = 'u8[16384]{0}', space=vmem, size = 0x4000, scoped, tag = 'input window, operand 3']
    #allocation10 [shape = 'u8[16384]{0}', space=vmem, size = 0x4000, scoped, tag = 'output window, operand 0']
    #allocation11 [shape = 'u8[16384]{0}', space=vmem, size = 0x4000, scoped, tag = 'output window, operand 1']
    #allocation12 [shape = 's32[2]{0}', space=sflag, size = 0x8, scoped, tag = 'scoped memory for tpu_custom_call.1']
    #allocation13 [shape = 'u8[16384]{0}', space=vmem, size = 0x4000, scoped, tag = 'output window, operand 2']
    %20 = vsyncpa [#allocation5], 0
    %s21 = scalar_lea.sflag [#allocation5], 1
    %22 = vsyncpa %s21, 0
    %23 = vsyncpa [#allocation8], 0
    %s24 = scalar_lea.sflag [#allocation8], 1
    %25 = vsyncpa %s24, 0
    %26 = vsyncpa [#allocation6], 0
    %s27 = scalar_lea.sflag [#allocation6], 1
    %28 = vsyncpa %s27, 0
    %29 = vsyncpa [#allocation12], 0
    %s30 = scalar_lea.sflag [#allocation12], 1
    %31 = vsyncpa %s30, 0
    loop: start=0, step=1, limit=4
    $region2: #{tpu_custom_call.1} parent=1 // loop_pre_header
      _
    $region3: #{tpu_custom_call.1} parent=1 // loop_header
      %s33 = sphi 0, %s37
      %p34 = scmp.ge.s32.totalorder %s33, 4
      %s40 = sphi 0, %s52
      %s41 = sphi 0, %s48
      %s42 = sphi 0, %s40
      %s43 = sphi 0, %s41
      %s44 = sphi 0, %s42
      %s45 = sphi 0, %s43
      %s57 = sphi 0, %s59
      %s60 = sphi 0, %s57
      %s61 = sphi 0, %s60
      %s77 = sphi 0, %s61
      %s85 = sphi 0, %s87
      %s88 = sphi 0, %s85
      %s89 = sphi 0, %s88
      %s105 = sphi 0, %s89
      %s113 = sphi 0, %s115
      %s116 = sphi 0, %s113
      %s117 = sphi 0, %s116
      %s133 = sphi 0, %s117
      %s141 = sphi 0, %s143
      %s144 = sphi 0, %s141
      %s145 = sphi 0, %s144
      %s161 = sphi 0, %s145
      %s169 = sphi 0, %s171
      %s172 = sphi 0, %s169
      %s173 = sphi 0, %s172
      %s189 = sphi 0, %s173
      %s197 = sphi 0, %s199
      %s200 = sphi 0, %s197
      %s201 = sphi 0, %s200
      %s217 = sphi 0, %s201
    $region4: #{tpu_custom_call.1} parent=1 // loop_header_branch
      %36 = sbr.rel (%p34) target = $region8
    $region5: #{tpu_custom_call.1} parent=1 // loop_body
      %s38 = ssub.s32 %s33, 1
      %s39 = ssub.s32 %s33, 2
      %s46 = sadd.s32 1, %s41
      %p47 = scmp.ge.s32.totalorder %s46, 2
      %s48 = scalar_select %p47, 0, %s46
      %s49 = sadd.s32 1, %s40
      %s50 = scalar_select %p47, %s49, %s40
      %p51 = scmp.ge.s32.totalorder %s50, 1
      %s52 = scalar_select %p51, 0, %s50
      %s53 = ssub.s32 %s40, %s52
      %s54 = ssub.s32 %s41, %s48
      %s55 = sor.u32 %s53, %s54
      %p56 = scmp.eq.s32.totalorder %s55, 0
      %s58 = sadd.s32 %s57, 1
      %s59 = scalar_select %p56, %s57, %s58
      %p62 = pneg %p56
      %p63 = scmp.eq.s32.totalorder %s33, 1
      %p64 = por %p62, %p63
      %p65 = scmp.ne.s32.totalorder %s57, %s60
      %p66 = scmp.eq.s32.totalorder %s33, 0
      %p67 = por %p65, %p66
      %p68 = scmp.ne.s32.totalorder %s57, %s60
      %p69 = scmp.eq.s32.totalorder %s38, 1
      %p70 = por %p68, %p69
      %p71 = scmp.ne.s32.totalorder %s60, %s61
      %p72 = scmp.eq.s32.totalorder %s38, 0
      %p73 = por %p71, %p72
      %p74 = scmp.ne.s32.totalorder %s60, %s61
      %p75 = scmp.eq.s32.totalorder %s39, 1
      %p76 = por %p74, %p75
      %p78 = scmp.ne.s32.totalorder %s61, %s77
      %p79 = scmp.eq.s32.totalorder %s39, 0
      %p80 = por %p78, %p79
      %s81 = ssub.s32 %s40, %s52
      %s82 = ssub.s32 %s41, %s48
      %s83 = sor.u32 %s81, %s82
      %p84 = scmp.eq.s32.totalorder %s83, 0
      %s86 = sadd.s32 %s85, 1
      %s87 = scalar_select %p84, %s85, %s86
      %p90 = pneg %p84
      %p91 = scmp.eq.s32.totalorder %s33, 1
      %p92 = por %p90, %p91
      %p93 = scmp.ne.s32.totalorder %s85, %s88
      %p94 = scmp.eq.s32.totalorder %s33, 0
      %p95 = por %p93, %p94
      %p96 = scmp.ne.s32.totalorder %s85, %s88
      %p97 = scmp.eq.s32.totalorder %s38, 1
      %p98 = por %p96, %p97
      %p99 = scmp.ne.s32.totalorder %s88, %s89
      %p100 = scmp.eq.s32.totalorder %s38, 0
      %p101 = por %p99, %p100
      %p102 = scmp.ne.s32.totalorder %s88, %s89
      %p103 = scmp.eq.s32.totalorder %s39, 1
      %p104 = por %p102, %p103
      %p106 = scmp.ne.s32.totalorder %s89, %s105
      %p107 = scmp.eq.s32.totalorder %s39, 0
      %p108 = por %p106, %p107
      %s109 = ssub.s32 %s40, %s52
      %s110 = ssub.s32 %s41, %s48
      %s111 = sor.u32 %s109, %s110
      %p112 = scmp.eq.s32.totalorder %s111, 0
      %s114 = sadd.s32 %s113, 1
      %s115 = scalar_select %p112, %s113, %s114
      %p118 = pneg %p112
      %p119 = scmp.eq.s32.totalorder %s33, 1
      %p120 = por %p118, %p119
      %p121 = scmp.ne.s32.totalorder %s113, %s116
      %p122 = scmp.eq.s32.totalorder %s33, 0
      %p123 = por %p121, %p122
      %p124 = scmp.ne.s32.totalorder %s113, %s116
      %p125 = scmp.eq.s32.totalorder %s38, 1
      %p126 = por %p124, %p125
      %p127 = scmp.ne.s32.totalorder %s116, %s117
      %p128 = scmp.eq.s32.totalorder %s38, 0
      %p129 = por %p127, %p128
      %p130 = scmp.ne.s32.totalorder %s116, %s117
      %p131 = scmp.eq.s32.totalorder %s39, 1
      %p132 = por %p130, %p131
      %p134 = scmp.ne.s32.totalorder %s117, %s133
      %p135 = scmp.eq.s32.totalorder %s39, 0
      %p136 = por %p134, %p135
      %s137 = ssub.s32 %s40, %s52
      %s138 = ssub.s32 %s41, %s48
      %s139 = sor.u32 %s137, %s138
      %p140 = scmp.eq.s32.totalorder %s139, 0
      %s142 = sadd.s32 %s141, 1
      %s143 = scalar_select %p140, %s141, %s142
      %p146 = pneg %p140
      %p147 = scmp.eq.s32.totalorder %s33, 1
      %p148 = por %p146, %p147
      %p149 = scmp.ne.s32.totalorder %s141, %s144
      %p150 = scmp.eq.s32.totalorder %s33, 0
      %p151 = por %p149, %p150
      %p152 = scmp.ne.s32.totalorder %s141, %s144
      %p153 = scmp.eq.s32.totalorder %s38, 1
      %p154 = por %p152, %p153
      %p155 = scmp.ne.s32.totalorder %s144, %s145
      %p156 = scmp.eq.s32.totalorder %s38, 0
      %p157 = por %p155, %p156
      %p158 = scmp.ne.s32.totalorder %s144, %s145
      %p159 = scmp.eq.s32.totalorder %s39, 1
      %p160 = por %p158, %p159
      %p162 = scmp.ne.s32.totalorder %s145, %s161
      %p163 = scmp.eq.s32.totalorder %s39, 0
      %p164 = por %p162, %p163
      %s165 = ssub.s32 %s40, %s52
      %s166 = ssub.s32 %s41, %s48
      %s167 = sor.u32 %s165, %s166
      %p168 = scmp.eq.s32.totalorder %s167, 0
      %s170 = sadd.s32 %s169, 1
      %s171 = scalar_select %p168, %s169, %s170
      %p174 = pneg %p168
      %p175 = scmp.eq.s32.totalorder %s33, 1
      %p176 = por %p174, %p175
      %p177 = scmp.ne.s32.totalorder %s169, %s172
      %p178 = scmp.eq.s32.totalorder %s33, 0
      %p179 = por %p177, %p178
      %p180 = scmp.ne.s32.totalorder %s169, %s172
      %p181 = scmp.eq.s32.totalorder %s38, 1
      %p182 = por %p180, %p181
      %p183 = scmp.ne.s32.totalorder %s172, %s173
      %p184 = scmp.eq.s32.totalorder %s38, 0
      %p185 = por %p183, %p184
      %p186 = scmp.ne.s32.totalorder %s172, %s173
      %p187 = scmp.eq.s32.totalorder %s39, 1
      %p188 = por %p186, %p187
      %p190 = scmp.ne.s32.totalorder %s173, %s189
      %p191 = scmp.eq.s32.totalorder %s39, 0
      %p192 = por %p190, %p191
      %s193 = ssub.s32 %s40, %s52
      %s194 = ssub.s32 %s41, %s48
      %s195 = sor.u32 %s193, %s194
      %p196 = scmp.eq.s32.totalorder %s195, 0
      %s198 = sadd.s32 %s197, 1
      %s199 = scalar_select %p196, %s197, %s198
      %p202 = pneg %p196
      %p203 = scmp.eq.s32.totalorder %s33, 1
      %p204 = por %p202, %p203
      %p205 = scmp.ne.s32.totalorder %s197, %s200
      %p206 = scmp.eq.s32.totalorder %s33, 0
      %p207 = por %p205, %p206
      %p208 = scmp.ne.s32.totalorder %s197, %s200
      %p209 = scmp.eq.s32.totalorder %s38, 1
      %p210 = por %p208, %p209
      %p211 = scmp.ne.s32.totalorder %s200, %s201
      %p212 = scmp.eq.s32.totalorder %s38, 0
      %p213 = por %p211, %p212
      %p214 = scmp.ne.s32.totalorder %s200, %s201
      %p215 = scmp.eq.s32.totalorder %s39, 1
      %p216 = por %p214, %p215
      %p218 = scmp.ne.s32.totalorder %s201, %s217
      %p219 = scmp.eq.s32.totalorder %s39, 0
      %p220 = por %p218, %p219
      %p221 = scmp.le.s32.totalorder 1, %s33
      %p222 = scmp.lt.s32.totalorder %s33, 3
      %p223 = pnand %p221, %p222
      %p224 = pneg %p223
      // Predicated region
      $region9: #{tpu_custom_call.1} parent=5 // pred_check
        _
      $region10: #{tpu_custom_call.1} parent=5 // pred_check_branch
        %226 = sbr.rel (%p223) target = $region12
      $region11: #{tpu_custom_call.1} parent=5 // pred_region
        %s227 = ssub.s32 %s33, 1
      $region12: #{tpu_custom_call.1} parent=5 // pred_fallthru
        _
      %p228 = scmp.lt.s32.totalorder %s33, 2
      // Predicated region
      $region13: #{tpu_custom_call.1} parent=5 // pred_check
        %p229 = pneg %p228
      $region14: #{tpu_custom_call.1} parent=5 // pred_check_branch
        %231 = sbr.rel (%p229) target = $region16
      $region15: #{tpu_custom_call.1} parent=5 // pred_region
        // Predicated region
        $region17: #{tpu_custom_call.1} parent=15 // pred_check
          %p232 = pneg %p67
        $region18: #{tpu_custom_call.1} parent=15 // pred_check_branch
          %234 = sbr.rel (%p232) target = $region20
        $region19: #{tpu_custom_call.1} parent=15 // pred_region
          %s235 = sand.u32 %s57, 1
          %s236 = scalar_lea.sflag [#allocation5], %s235
          %s237 = sand.u32 %s57, 1
          %s238 = smul.addr %s237, 16
          %s239 = scalar_lea.vmem [#allocation4], %s238
          %s240 = smul.u32 2, %s40
          %242 = vsyncadd %s236, 0
          %s243 = smul.addr %s240, 2
          %s244 = sadd.s32 %s41, %s243
          %s245 = smul.addr %s244, 8
          %s246 = scalar_lea.hbm %s1, %s245
          %s247 = sshll.u32 %s246, 4
          %s248 = int_to_ptr.hbm [resolvable:$true] %s247
          %s249 = sshll.u32 %s239, 4
          %s250 = int_to_ptr.vmem [resolvable:$true] %s249
          %255 = dma.hbm_to_vmem [thread:$0]  %s248, 256, %s250, %s236, 256, 128, 8
        $region20: #{tpu_custom_call.1} parent=15 // pred_fallthru
          _
        // Predicated region
        $region21: #{tpu_custom_call.1} parent=15 // pred_check
          %p256 = pneg %p95
        $region22: #{tpu_custom_call.1} parent=15 // pred_check_branch
          %258 = sbr.rel (%p256) target = $region24
        $region23: #{tpu_custom_call.1} parent=15 // pred_region
          %s259 = sand.u32 %s33, 1
          %s260 = scalar_lea.sflag [#allocation8], %s259
          %s261 = sand.u32 %s85, 1
          %s262 = smul.addr %s261, 16
          %s263 = scalar_lea.vmem [#allocation7], %s262
          %s264 = smul.u32 2, %s40
          %266 = vsyncadd %s260, 0
          %s267 = smul.addr %s264, 2
          %s268 = sadd.s32 %s41, %s267
          %s269 = smul.addr %s268, 8
          %s270 = scalar_lea.hbm %s2, %s269
          %s271 = sshll.u32 %s270, 4
          %s272 = int_to_ptr.hbm [resolvable:$true] %s271
          %s273 = sshll.u32 %s263, 4
          %s274 = int_to_ptr.vmem [resolvable:$true] %s273
          %279 = dma.hbm_to_vmem [thread:$0]  %s272, 256, %s274, %s260, 256, 128, 8
        $region24: #{tpu_custom_call.1} parent=15 // pred_fallthru
          _
        // Predicated region
        $region25: #{tpu_custom_call.1} parent=15 // pred_check
          %p280 = pneg %p123
        $region26: #{tpu_custom_call.1} parent=15 // pred_check_branch
          %282 = sbr.rel (%p280) target = $region28
        $region27: #{tpu_custom_call.1} parent=15 // pred_region
          %s283 = sand.u32 %s33, 1
          %s284 = scalar_lea.sflag [#allocation8], %s283
          %s285 = sand.u32 %s113, 1
          %s286 = smul.addr %s285, 16
          %s287 = scalar_lea.vmem [#allocation9], %s286
          %s288 = smul.u32 2, %s40
          %290 = vsyncadd %s284, 0
          %s291 = smul.addr %s288, 2
          %s292 = sadd.s32 %s41, %s291
          %s293 = smul.addr %s292, 8
          %s294 = scalar_lea.hbm %s3, %s293
          %s295 = sshll.u32 %s294, 4
          %s296 = int_to_ptr.hbm [resolvable:$true] %s295
          %s297 = sshll.u32 %s287, 4
          %s298 = int_to_ptr.vmem [resolvable:$true] %s297
          %303 = dma.hbm_to_vmem [thread:$0]  %s296, 256, %s298, %s284, 256, 128, 8
        $region28: #{tpu_custom_call.1} parent=15 // pred_fallthru
          _
      $region16: #{tpu_custom_call.1} parent=5 // pred_fallthru
        _
      %p304 = scmp.le.s32.totalorder 1, %s33
      %p305 = scmp.lt.s32.totalorder %s33, 3
      %p306 = pnand %p304, %p305
      %p307 = pneg %p306
      // Predicated region
      $region29: #{tpu_custom_call.1} parent=5 // pred_check
        _
      $region30: #{tpu_custom_call.1} parent=5 // pred_check_branch
        %309 = sbr.rel (%p306) target = $region32
      $region31: #{tpu_custom_call.1} parent=5 // pred_region
        %s310 = ssub.s32 %s33, 1
        %s311 = sand.u32 %s60, 1
        %s312 = scalar_lea.sflag [#allocation5], %s311
        %s313 = sand.u32 %s60, 1
        %s314 = smul.addr %s313, 16
        %s315 = scalar_lea.vmem [#allocation4], %s314
        // Predicated region
        $region33: #{tpu_custom_call.1} parent=31 // pred_check
          %p316 = pneg %p73
        $region34: #{tpu_custom_call.1} parent=31 // pred_check_branch
          %318 = sbr.rel (%p316) target = $region36
        $region35: #{tpu_custom_call.1} parent=31 // pred_region
          %320 = dma.done %s312, 256
        $region36: #{tpu_custom_call.1} parent=31 // pred_fallthru
          _
        %s321 = sand.u32 %s38, 1
        %s322 = scalar_lea.sflag [#allocation8], %s321
        %s323 = sand.u32 %s88, 1
        %s324 = smul.addr %s323, 16
        %s325 = scalar_lea.vmem [#allocation7], %s324
        // Predicated region
        $region37: #{tpu_custom_call.1} parent=31 // pred_check
          %p326 = pneg %p101
        $region38: #{tpu_custom_call.1} parent=31 // pred_check_branch
          %328 = sbr.rel (%p326) target = $region40
        $region39: #{tpu_custom_call.1} parent=31 // pred_region
          %330 = dma.done %s322, 256
        $region40: #{tpu_custom_call.1} parent=31 // pred_fallthru
          _
        %s331 = sand.u32 %s38, 1
        %s332 = scalar_lea.sflag [#allocation8], %s331
        %s333 = sand.u32 %s116, 1
        %s334 = smul.addr %s333, 16
        %s335 = scalar_lea.vmem [#allocation9], %s334
        // Predicated region
        $region41: #{tpu_custom_call.1} parent=31 // pred_check
          %p336 = pneg %p129
        $region42: #{tpu_custom_call.1} parent=31 // pred_check_branch
          %338 = sbr.rel (%p336) target = $region44
        $region43: #{tpu_custom_call.1} parent=31 // pred_region
          %340 = dma.done %s332, 256
        $region44: #{tpu_custom_call.1} parent=31 // pred_fallthru
          _
        %s341 = sand.u32 %s60, 1
        %s342 = scalar_lea.sflag [#allocation5], %s341
        %s343 = sand.u32 %s60, 1
        %s344 = smul.addr %s343, 16
        %s345 = scalar_lea.vmem [#allocation4], %s344
        %p346 = pneg %p73
        %p347 = pneg %p70
        %s348 = sand.u32 %s38, 1
        %s349 = scalar_lea.sflag [#allocation8], %s348
        %s350 = sand.u32 %s88, 1
        %s351 = smul.addr %s350, 16
        %s352 = scalar_lea.vmem [#allocation7], %s351
        %p353 = pneg %p101
        %p354 = pneg %p98
        %s355 = sand.u32 %s38, 1
        %s356 = scalar_lea.sflag [#allocation8], %s355
        %s357 = sand.u32 %s116, 1
        %s358 = smul.addr %s357, 16
        %s359 = scalar_lea.vmem [#allocation9], %s358
        %p360 = pneg %p129
        %p361 = pneg %p126
        %p362 = pneg %p157
        %p363 = pneg %p154
        %s364 = sand.u32 %s144, 1
        %s365 = scalar_lea.sflag [#allocation6], %s364
        %s366 = sand.u32 %s144, 1
        %s367 = smul.addr %s366, 16
        %s368 = scalar_lea.vmem [#allocation10], %s367
        %p369 = pneg %p185
        %p370 = pneg %p182
        %s371 = sand.u32 %s38, 1
        %s372 = scalar_lea.sflag [#allocation12], %s371
        %s373 = sand.u32 %s172, 1
        %s374 = smul.addr %s373, 16
        %s375 = scalar_lea.vmem [#allocation11], %s374
        %p376 = pneg %p213
        %p377 = pneg %p210
        %s378 = sand.u32 %s38, 1
        %s379 = scalar_lea.sflag [#allocation12], %s378
        %s380 = sand.u32 %s200, 1
        %s381 = smul.addr %s380, 16
        %s382 = scalar_lea.vmem [#allocation13], %s381
        %s383 = smul.u32 2, %s42
        %s384 = smul.u32 2, %s42
        %s385 = smul.u32 2, %s42
        %s386 = smul.u32 2, %s42
        %s387 = smul.u32 2, %s42
        %s388 = smul.u32 2, %s42
        %s389 = sld [smem:[#allocation3]]
        %s390 = sld [smem:[#allocation3 + $0x1]]
        %s391 = sld [smem:[#allocation3 + $0x2]]
        %s392 = sld [smem:[#allocation3 + $0x80]]
        %s393 = sld [smem:[#allocation3 + $0x81]]
        %s394 = sld [smem:[#allocation3 + $0x82]]
        %s395 = sld [smem:[#allocation3 + $0x100]]
        %s396 = sld [smem:[#allocation3 + $0x101]]
        %s397 = sld [smem:[#allocation3 + $0x102]]
        %v398 = vld [vmem:[%s315] sm:$0xff]
        %v399 = vld [vmem:[%s315 + $0x8] sm:$0xff]
        %v400 = vstv %s389
        %v401 = vmul.f32 %v398, %v400
        %v402 = vmul.f32 %v399, %v400
        %v403 = vld [vmem:[%s325] sm:$0xff]
        %v404 = vld [vmem:[%s325 + $0x8] sm:$0xff]
        %v405 = vstv %s392
        %v406 = vmul.f32 %v403, %v405
        %v407 = vmul.f32 %v404, %v405
        %v408 = vadd.f32 %v401, %v406
        %v409 = vadd.f32 %v402, %v407
        %v410 = vld [vmem:[%s335] sm:$0xff]
        %v411 = vld [vmem:[%s335 + $0x8] sm:$0xff]
        %v412 = vstv %s395
        %v413 = vmul.f32 %v410, %v412
        %v414 = vmul.f32 %v411, %v412
        %v415 = vadd.f32 %v408, %v413
        %v416 = vadd.f32 %v409, %v414
        %417 = vst [vmem:[%s368] sm:$0xff] %v415
        %418 = vst [vmem:[%s368 + $0x8] sm:$0xff] %v416
        %v419 = vld [vmem:[%s315] sm:$0xff]
        %v420 = vld [vmem:[%s315 + $0x8] sm:$0xff]
        %v421 = vstv %s390
        %v422 = vmul.f32 %v419, %v421
        %v423 = vmul.f32 %v420, %v421
        %v424 = vld [vmem:[%s325] sm:$0xff]
        %v425 = vld [vmem:[%s325 + $0x8] sm:$0xff]
        %v426 = vstv %s393
        %v427 = vmul.f32 %v424, %v426
        %v428 = vmul.f32 %v425, %v426
        %v429 = vadd.f32 %v422, %v427
        %v430 = vadd.f32 %v423, %v428
        %v431 = vld [vmem:[%s335] sm:$0xff]
        %v432 = vld [vmem:[%s335 + $0x8] sm:$0xff]
        %v433 = vstv %s396
        %v434 = vmul.f32 %v431, %v433
        %v435 = vmul.f32 %v432, %v433
        %v436 = vadd.f32 %v429, %v434
        %v437 = vadd.f32 %v430, %v435
        %438 = vst [vmem:[%s375] sm:$0xff] %v436
        %439 = vst [vmem:[%s375 + $0x8] sm:$0xff] %v437
        %v440 = vld [vmem:[%s315] sm:$0xff]
        %v441 = vld [vmem:[%s315 + $0x8] sm:$0xff]
        %v442 = vstv %s391
        %v443 = vmul.f32 %v440, %v442
        %v444 = vmul.f32 %v441, %v442
        %v445 = vld [vmem:[%s325] sm:$0xff]
        %v446 = vld [vmem:[%s325 + $0x8] sm:$0xff]
        %v447 = vstv %s394
        %v448 = vmul.f32 %v445, %v447
        %v449 = vmul.f32 %v446, %v447
        %v450 = vadd.f32 %v443, %v448
        %v451 = vadd.f32 %v444, %v449
        %v452 = vld [vmem:[%s335] sm:$0xff]
        %v453 = vld [vmem:[%s335 + $0x8] sm:$0xff]
        %v454 = vstv %s397
        %v455 = vmul.f32 %v452, %v454
        %v456 = vmul.f32 %v453, %v454
        %v457 = vadd.f32 %v450, %v455
        %v458 = vadd.f32 %v451, %v456
        %459 = vst [vmem:[%s382] sm:$0xff] %v457
        %460 = vst [vmem:[%s382 + $0x8] sm:$0xff] %v458
        %s461 = sand.u32 %s144, 1
        %s462 = scalar_lea.sflag [#allocation6], %s461
        %s463 = sand.u32 %s144, 1
        %s464 = smul.addr %s463, 16
        %s465 = scalar_lea.vmem [#allocation10], %s464
        %s466 = sand.u32 %s38, 1
        %s467 = scalar_lea.sflag [#allocation12], %s466
        %s468 = sand.u32 %s172, 1
        %s469 = smul.addr %s468, 16
        %s470 = scalar_lea.vmem [#allocation11], %s469
        %s471 = sand.u32 %s38, 1
        %s472 = scalar_lea.sflag [#allocation12], %s471
        %s473 = sand.u32 %s200, 1
        %s474 = smul.addr %s473, 16
        %s475 = scalar_lea.vmem [#allocation13], %s474
        // Predicated region
        $region45: #{tpu_custom_call.1} parent=31 // pred_check
          %p476 = pneg %p154
        $region46: #{tpu_custom_call.1} parent=31 // pred_check_branch
          %478 = sbr.rel (%p476) target = $region48
        $region47: #{tpu_custom_call.1} parent=31 // pred_region
          %s479 = smul.u32 2, %s42
          %481 = vsyncadd %s462, 0
          %s482 = smul.addr %s479, 2
          %s483 = sadd.s32 %s43, %s482
          %s484 = smul.addr %s483, 8
          %s485 = scalar_lea.hbm %s4, %s484
          %s486 = sshll.u32 %s465, 4
          %s487 = int_to_ptr.vmem [resolvable:$true] %s486
          %s488 = sshll.u32 %s485, 4
          %s489 = int_to_ptr.hbm [resolvable:$true] %s488
          %494 = dma.vmem_to_hbm [thread:$0]  %s487, 256, %s489, %s462, 128, 256, 8
        $region48: #{tpu_custom_call.1} parent=31 // pred_fallthru
          _
        // Predicated region
        $region49: #{tpu_custom_call.1} parent=31 // pred_check
          %p495 = pneg %p182
        $region50: #{tpu_custom_call.1} parent=31 // pred_check_branch
          %497 = sbr.rel (%p495) target = $region52
        $region51: #{tpu_custom_call.1} parent=31 // pred_region
          %s498 = smul.u32 2, %s42
          %500 = vsyncadd %s467, 0
          %s501 = smul.addr %s498, 2
          %s502 = sadd.s32 %s43, %s501
          %s503 = smul.addr %s502, 8
          %s504 = scalar_lea.hbm %s5, %s503
          %s505 = sshll.u32 %s470, 4
          %s506 = int_to_ptr.vmem [resolvable:$true] %s505
          %s507 = sshll.u32 %s504, 4
          %s508 = int_to_ptr.hbm [resolvable:$true] %s507
          %513 = dma.vmem_to_hbm [thread:$0]  %s506, 256, %s508, %s467, 128, 256, 8
        $region52: #{tpu_custom_call.1} parent=31 // pred_fallthru
          _
        // Predicated region
        $region53: #{tpu_custom_call.1} parent=31 // pred_check
          %p514 = pneg %p210
        $region54: #{tpu_custom_call.1} parent=31 // pred_check_branch
          %516 = sbr.rel (%p514) target = $region56
        $region55: #{tpu_custom_call.1} parent=31 // pred_region
          %s517 = smul.u32 2, %s42
          %519 = vsyncadd %s472, 0
          %s520 = smul.addr %s517, 2
          %s521 = sadd.s32 %s43, %s520
          %s522 = smul.addr %s521, 8
          %s523 = scalar_lea.hbm %s6, %s522
          %s524 = sshll.u32 %s475, 4
          %s525 = int_to_ptr.vmem [resolvable:$true] %s524
          %s526 = sshll.u32 %s523, 4
          %s527 = int_to_ptr.hbm [resolvable:$true] %s526
          %532 = dma.vmem_to_hbm [thread:$0]  %s525, 256, %s527, %s472, 128, 256, 8
        $region56: #{tpu_custom_call.1} parent=31 // pred_fallthru
          _
      $region32: #{tpu_custom_call.1} parent=5 // pred_fallthru
        _
      %p533 = scmp.le.s32.totalorder 2, %s33
      // Predicated region
      $region57: #{tpu_custom_call.1} parent=5 // pred_check
        %p534 = pneg %p533
      $region58: #{tpu_custom_call.1} parent=5 // pred_check_branch
        %536 = sbr.rel (%p534) target = $region60
      $region59: #{tpu_custom_call.1} parent=5 // pred_region
        %s537 = ssub.s32 %s33, 2
        // Predicated region
        $region61: #{tpu_custom_call.1} parent=59 // pred_check
          %p538 = pneg %p160
        $region62: #{tpu_custom_call.1} parent=59 // pred_check_branch
          %540 = sbr.rel (%p538) target = $region64
        $region63: #{tpu_custom_call.1} parent=59 // pred_region
          %s541 = sand.u32 %s145, 1
          %s542 = scalar_lea.sflag [#allocation6], %s541
          %s543 = sand.u32 %s145, 1
          %s544 = smul.addr %s543, 16
          %s545 = scalar_lea.vmem [#allocation10], %s544
          %547 = dma.done %s542, 256
        $region64: #{tpu_custom_call.1} parent=59 // pred_fallthru
          _
        // Predicated region
        $region65: #{tpu_custom_call.1} parent=59 // pred_check
          %p548 = pneg %p188
        $region66: #{tpu_custom_call.1} parent=59 // pred_check_branch
          %550 = sbr.rel (%p548) target = $region68
        $region67: #{tpu_custom_call.1} parent=59 // pred_region
          %s551 = sand.u32 %s39, 1
          %s552 = scalar_lea.sflag [#allocation12], %s551
          %s553 = sand.u32 %s173, 1
          %s554 = smul.addr %s553, 16
          %s555 = scalar_lea.vmem [#allocation11], %s554
          %557 = dma.done %s552, 256
        $region68: #{tpu_custom_call.1} parent=59 // pred_fallthru
          _
        // Predicated region
        $region69: #{tpu_custom_call.1} parent=59 // pred_check
          %p558 = pneg %p216
        $region70: #{tpu_custom_call.1} parent=59 // pred_check_branch
          %560 = sbr.rel (%p558) target = $region72
        $region71: #{tpu_custom_call.1} parent=59 // pred_region
          %s561 = sand.u32 %s39, 1
          %s562 = scalar_lea.sflag [#allocation12], %s561
          %s563 = sand.u32 %s201, 1
          %s564 = smul.addr %s563, 16
          %s565 = scalar_lea.vmem [#allocation13], %s564
          %567 = dma.done %s562, 256
        $region72: #{tpu_custom_call.1} parent=59 // pred_fallthru
          _
      $region60: #{tpu_custom_call.1} parent=5 // pred_fallthru
        _
    $region6: #{tpu_custom_call.1} parent=1 // loop_footer
      %s37 = sadd.s32 1, %s33
    $region7: #{tpu_custom_call.1} parent=1 // loop_footer_branch
      %32 = sbr.rel target = $region3
    $region8: #{tpu_custom_call.1} parent=1 // loop_exit
      _
    %568 = vsyncpa [#allocation5], 1
    %s569 = scalar_lea.sflag [#allocation5], 1
    %570 = vsyncpa %s569, 1
    %571 = vsyncpa [#allocation8], 1
    %s572 = scalar_lea.sflag [#allocation8], 1
    %573 = vsyncpa %s572, 1
    %574 = vsyncpa [#allocation6], 1
    %s575 = scalar_lea.sflag [#allocation6], 1
    %576 = vsyncpa %s575, 1
    %577 = vsyncpa [#allocation12], 1
    %s578 = scalar_lea.sflag [#allocation12], 1
    %579 = vsyncpa %s578, 1

</llo_original>
